<compile_context>
chip_gen: v6e
topology: v6e:2x2x1
jax: 0.10.0
libtpu: 0.0.40
codegen_flags: <defaults>
</compile_context>

<pallas_src>
import jax
import jax.numpy as jnp
from jax.experimental import pallas as pl
from jax.experimental.pallas import tpu as pltpu
from typing import Dict, List, Optional


def _round_up(x: int, m: int) -> int:
    return ((x + m - 1) // m) * m


_VMEM_TILE_BUDGET = 24 * 1024 * 1024   # budget used to size tm (safe on v5e/v6e/v7x)
_VMEM_LIMIT_BYTES = 48 * 1024 * 1024   # raised scoped-VMEM limit (< v7x 64 MiB physical)


def _choose_tm(M: int, D: int, np_total: int, out_itemsize: int, x_itemsize: int) -> int:
    """Largest row-tile that fits the VMEM budget, balanced over M."""
    resident = D * np_total * 2 + np_total * 4            # bf16 W + f32 bias (single-buffered)
    per_row = (2 * D * x_itemsize                          # x block (double-buffered)
               + D * 2                                     # in-kernel bf16 copy of x
               + 2 * np_total * out_itemsize               # per-head out blocks (double-buffered)
               + np_total * 4                              # f32 accumulator
               + 2 * 4)                                    # (tm, 1) mask column
    avail = _VMEM_TILE_BUDGET - resident
    if avail <= per_row * 8:
        tm_cap = 8
    else:
        tm_cap = max(8, min(512, (avail // per_row) // 8 * 8))
    # Balance tiles (avoid a ragged tile that is mostly dead rows) and make sure
    # v7x's second TensorCore gets work once M is big enough.
    min_tiles = 2 if M >= 512 else 1
    n_tiles = max(min_tiles, -(-M // tm_cap))
    tm = min(tm_cap, _round_up(-(-M // n_tiles), 8))
    return max(8, tm)


# ----------------------------------------------------------------------------
# Pallas kernel: acc = (bf16(X) @ W_fused + b) [* mask] ; per-head lane-aligned stores
# ----------------------------------------------------------------------------
def _make_fused_kernel(n_heads: int, offsets, widths, with_mask: bool):
    def kernel(x_ref, w_ref, b_ref, *rest):
        if with_mask:
            m_ref = rest[0]
            out_refs = rest[1:]
        else:
            out_refs = rest
        # f32 -> bf16 cast happens in-kernel (VPU filler hidden under MXU/DMA),
        # so no padded/cast copy of X is materialized in HBM by the wrapper.
        x_bf = x_ref[...].astype(jnp.bfloat16)
        acc = jnp.dot(x_bf, w_ref[...], preferred_element_type=jnp.float32)
        acc = acc + b_ref[...]
        if with_mask:
            acc = acc * m_ref[...]            # (tm, 1) broadcast over lanes
        if n_heads == 1:
            out_refs[0][...] = acc.astype(out_refs[0].dtype)
        else:
            for h in range(n_heads):          # static, lane-aligned (multiples of 128) slices
                sl = acc[:, offsets[h]:offsets[h] + widths[h]]
                out_refs[h][...] = sl.astype(out_refs[h].dtype)
    return kernel


def fused_linear_heads(
    x2d: jnp.ndarray,                   # (M, D) float (f32 or bf16), unpadded
    w_fused: jnp.ndarray,               # (D, Np) bf16, per-head zero-padded to x128, pre-concatenated
    b_fused: jnp.ndarray,               # (1, Np) f32, zero-padded to match
    head_widths_padded: List[int],      # per-head padded widths, each a multiple of 128
    mask1d: Optional[jnp.ndarray] = None,   # (M,) or None
    out_dtype=jnp.bfloat16,
) -> List[jnp.ndarray]:
    """Returns one (M, Nh_pad) array per head: (x @ w + b) [* mask], f32 accumulate."""
    M, D = x2d.shape
    Dw, Np = w_fused.shape
    assert D == Dw and b_fused.shape == (1, Np) and sum(head_widths_padded) == Np

    with_mask = mask1d is not None
    out_itemsize = jnp.dtype(out_dtype).itemsize
    tm = _choose_tm(M, D, Np, out_itemsize, x2d.dtype.itemsize)
    grid_m = pl.cdiv(M, tm)

    offsets, off = [], 0
    for w in head_widths_padded:
        offsets.append(off)
        off += w
    n_heads = len(head_widths_padded)

    kernel = _make_fused_kernel(n_heads, tuple(offsets), tuple(head_widths_padded), with_mask)

    out_shape = tuple(jax.ShapeDtypeStruct((M, w), out_dtype) for w in head_widths_padded)
    out_specs = [pl.BlockSpec((tm, w), lambda i: (i, 0)) for w in head_widths_padded]

    cost = pl.CostEstimate(
        flops=2 * M * Np * D,
        transcendentals=0,
        bytes_accessed=int(M * D * x2d.dtype.itemsize) + D * Np * 2 + Np * 4
        + (M * 4 if with_mask else 0) + M * Np * out_itemsize,
    )

    def build(single_buffer_resident: bool):
        resident_kw = dict(pipeline_mode=pl.Buffered(1)) if single_buffer_resident else {}
        in_specs = [
            pl.BlockSpec((tm, D), lambda i: (i, 0)),                    # X: tiled over M, ragged edge OK
            pl.BlockSpec((D, Np), lambda i: (0, 0), **resident_kw),     # fused weights: resident
            pl.BlockSpec((1, Np), lambda i: (0, 0), **resident_kw),     # fused bias: resident
        ]
        if with_mask:
            in_specs.append(pl.BlockSpec((tm, 1), lambda i: (i, 0)))    # mask column: tiled over M
        return pl.pallas_call(
            kernel,
            out_shape=out_shape,
            grid_spec=pltpu.PrefetchScalarGridSpec(
                num_scalar_prefetch=0,
                grid=(grid_m,),
                in_specs=in_specs,
                out_specs=out_specs,
            ),
            compiler_params=pltpu.CompilerParams(
                dimension_semantics=("parallel",),       # megacore sharding over M on v7x
                vmem_limit_bytes=_VMEM_LIMIT_BYTES,
            ),
            cost_estimate=cost,
        )

    args = [x2d, w_fused, b_fused]
    if with_mask:
        args.append(mask1d.astype(jnp.float32).reshape(M, 1))

    try:
        outs = build(True)(*args)
    except Exception:
        # TODO(synk): pl.Buffered(1) single-buffering of the resident weights is not
        # supported on this jax build; fall back to default double-buffering.
        outs = build(False)(*args)
    return list(outs)


# ----------------------------------------------------------------------------
# JAX-side mirror of the PyTorch module structure
# ----------------------------------------------------------------------------
class DecoderBase:
    """Base class for all modular decoders (mirrors the abstract torch class)."""

    def __init__(self, d_model: int):
        self.d_model = d_model

    def __call__(
        self,
        hidden_states: jnp.ndarray,
        encoder_contexts: Dict[str, jnp.ndarray],
        mask: Optional[jnp.ndarray] = None,
    ) -> Dict[str, jnp.ndarray]:
        raise NotImplementedError


class LinearHeadDecoder(DecoderBase):
    """Concrete decoder: a single linear projection head, Pallas-backed."""

    def __init__(self, d_model: int, out_dim: int, output_key: str, key: jax.Array,
                 out_dtype=jnp.bfloat16):
        super().__init__(d_model)
        self.out_dim = out_dim
        self.output_key = output_key
        self.out_dtype = out_dtype
        kw, kb = jax.random.split(key)
        scale = 1.0 / jnp.sqrt(jnp.float32(d_model))
        self.weight = jax.random.normal(kw, (d_model, out_dim), jnp.float32) * scale
        self.bias = jax.random.normal(kb, (out_dim,), jnp.float32) * 0.01
        # Hoisted (construction-time) lane-padded bf16 weight / f32 bias for the kernel.
        self.out_pad = _round_up(out_dim, 128)
        self._w_pad = (jnp.zeros((d_model, self.out_pad), jnp.bfloat16)
                       .at[:, :out_dim].set(self.weight.astype(jnp.bfloat16)))
        self._b_pad = (jnp.zeros((1, self.out_pad), jnp.float32)
                       .at[:, :out_dim].set(self.bias[None, :]))

    def __call__(
        self,
        hidden_states: jnp.ndarray,  # (B, S, d_model)
        encoder_contexts: Dict[str, jnp.ndarray],
        mask: Optional[jnp.ndarray] = None,
    ) -> Dict[str, jnp.ndarray]:
        B, S, D = hidden_states.shape
        x2d = hidden_states.reshape(B * S, D)
        m1d = None if mask is None else mask.reshape(B * S)
        (y,) = fused_linear_heads(x2d, self._w_pad, self._b_pad, [self.out_pad], m1d,
                                  out_dtype=self.out_dtype)
        if self.out_dim != self.out_pad:
            y = y[:, :self.out_dim]
        return {self.output_key: y.reshape(B, S, self.out_dim)}


class OrderedDecoderRegistry:
    """Manages multiple decoders and applies them in a specific order.

    All LinearHeadDecoder members are executed as ONE fused Pallas kernel whose
    weights/biases are concatenated (lane-padded per head) once at construction;
    other DecoderBase subclasses fall back to their own __call__.  Output-dict
    merge order matches the original torch module.
    """

    def __init__(self, decoders: Dict[str, DecoderBase], order: Optional[List[str]] = None,
                 out_dtype=jnp.bfloat16):
        self.decoders = dict(decoders)
        self.order = order if order is not None else sorted(decoders.keys())
        self.out_dtype = out_dtype

        # Construction-time fusion cache (hoisted out of the forward path).
        self._linear_names = [n for n in self.order
                              if n in self.decoders
                              and isinstance(self.decoders[n], LinearHeadDecoder)]
        if self._linear_names:
            heads = [self.decoders[n] for n in self._linear_names]
            self._head_pad = [h.out_pad for h in heads]
            self._w_fused = jnp.concatenate([h._w_pad for h in heads], axis=1)   # (D, sum Nh_pad) bf16
            self._b_fused = jnp.concatenate([h._b_pad for h in heads], axis=1)   # (1, sum Nh_pad) f32
        else:
            self._head_pad, self._w_fused, self._b_fused = [], None, None

    def __call__(
        self,
        hidden_states: jnp.ndarray,
        encoder_contexts: Dict[str, jnp.ndarray],
        mask: Optional[jnp.ndarray] = None,
    ) -> Dict[str, jnp.ndarray]:
        B, S, D = hidden_states.shape
        linear_out: Dict[str, jnp.ndarray] = {}
        if self._linear_names:
            x2d = hidden_states.reshape(B * S, D)
            m1d = None if mask is None else mask.reshape(B * S)
            outs = fused_linear_heads(x2d, self._w_fused, self._b_fused,
                                      self._head_pad, m1d, out_dtype=self.out_dtype)
            for name, y in zip(self._linear_names, outs):
                dec = self.decoders[name]
                if dec.out_dim != y.shape[1]:
                    y = y[:, :dec.out_dim]
                linear_out[name] = y.reshape(B, S, dec.out_dim)

        outputs: Dict[str, jnp.ndarray] = {}
        for name in self.order:
            if name not in self.decoders:
                continue
            dec = self.decoders[name]
            if isinstance(dec, LinearHeadDecoder):
                outputs[dec.output_key] = linear_out[name]
            else:
                outputs.update(dec(hidden_states, encoder_contexts, mask))
        return outputs


# ----------------------------------------------------------------------------
# Demo / smoke test
# ----------------------------------------------------------------------------
if __name__ == "__main__":
    key = jax.random.PRNGKey(0)
    k_h, k_m, k_d1, k_d2 = jax.random.split(key, 4)

    B, S, D = 2, 8, 32
    hidden_states = jax.random.normal(k_h, (B, S, D), jnp.float32)
    mask = (jax.random.uniform(k_m, (B, S)) > 0.2).astype(jnp.float32)
    encoder_contexts = {"composition": jax.random.normal(k_m, (B, S, D), jnp.float32)}

    decoders = {
        "lattice": LinearHeadDecoder(D, out_dim=64, output_key="lattice_logits", key=k_d1),
        "atoms": LinearHeadDecoder(D, out_dim=16, output_key="atom_logits", key=k_d2),
    }
    registry = OrderedDecoderRegistry(decoders)  # order = sorted keys: ["atoms", "lattice"]

    outputs = registry(hidden_states, encoder_contexts, mask)          # masked kernel variant
    outputs_nomask = registry(hidden_states, encoder_contexts, None)   # unmasked kernel variant
    jax.block_until_ready((outputs, outputs_nomask))

    # Pure-JAX reference with the same bf16-operand / f32-accumulate / bf16-output numerics.
    ok = True
    h_bf = hidden_states.astype(jnp.bfloat16).astype(jnp.float32)
    for name in registry.order:
        dec = registry.decoders[name]
        w_bf = dec.weight.astype(jnp.bfloat16).astype(jnp.float32)
        ref = jnp.einsum("bsd,dn->bsn", h_bf, w_bf) + dec.bias
        ref_m = (ref * mask[..., None]).astype(dec.out_dtype).astype(jnp.float32)
        ref_u = ref.astype(dec.out_dtype).astype(jnp.float32)

        got_m = outputs[dec.output_key]
        got_u = outputs_nomask[dec.output_key]
        assert got_m.shape == (B, S, dec.out_dim) and got_m.dtype == dec.out_dtype
        ok = ok and bool(jnp.allclose(got_m.astype(jnp.float32), ref_m, atol=2e-2, rtol=2e-2))
        ok = ok and bool(jnp.allclose(got_u.astype(jnp.float32), ref_u, atol=2e-2, rtol=2e-2))

    # Stand-alone decoder call goes through the same kernel (single head).
    single = decoders["atoms"](hidden_states, encoder_contexts, mask)["atom_logits"]
    jax.block_until_ready(single)
    ok = ok and bool(jnp.allclose(single.astype(jnp.float32),
                                  outputs["atom_logits"].astype(jnp.float32),
                                  atol=2e-2, rtol=2e-2))

    print("KERNEL_OK" if ok else "MISMATCH")
</pallas_src>

<mosaic_0001>
module attributes {stable_mosaic.version = 11 : i64} {
  func.func @kernel(%arg0: i32, %arg1: memref<16x32xf32, #tpu.memory_space<vmem>>, %arg2: memref<32x256xbf16, #tpu.memory_space<vmem>>, %arg3: memref<1x256xf32, #tpu.memory_space<vmem>>, %arg4: memref<16x1xf32, #tpu.memory_space<vmem>>, %arg5: memref<16x128xbf16, #tpu.memory_space<vmem>>, %arg6: memref<16x128xbf16, #tpu.memory_space<vmem>>) attributes {dimension_semantics = [#tpu.dimension_semantics<parallel>], iteration_bounds = array<i64: 1>, scalar_prefetch = 0 : i64, scratch_operands = 0 : i64, tpu.core_type = #tpu.core_type<tc>, window_params = [{transform_indices = @transform_0, window_bounds = array<i64: 16, 32>}, {pipeline_mode = #tpu.pipeline_mode<synchronous>, transform_indices = @transform_1, window_bounds = array<i64: 32, 256>}, {pipeline_mode = #tpu.pipeline_mode<synchronous>, transform_indices = @transform_2, window_bounds = array<i64: 1, 256>}, {transform_indices = @transform_3, window_bounds = array<i64: 16, 1>}, {transform_indices = @transform_4, window_bounds = array<i64: 16, 128>}, {transform_indices = @transform_5, window_bounds = array<i64: 16, 128>}]} {
    %c0 = arith.constant 0 : index
    %c0_0 = arith.constant 0 : index
    %0 = vector.load %arg1[%c0, %c0_0] : memref<16x32xf32, #tpu.memory_space<vmem>>, vector<16x32xf32>
    %1 = arith.truncf %0 : vector<16x32xf32> to vector<16x32xbf16>
    %c0_1 = arith.constant 0 : index
    %c0_2 = arith.constant 0 : index
    %2 = vector.load %arg2[%c0_1, %c0_2] : memref<32x256xbf16, #tpu.memory_space<vmem>>, vector<32x256xbf16>
    %cst = arith.constant dense<0.000000e+00> : vector<16x256xf32>
    %3 = tpu.matmul %1, %2, %cst {dimension_numbers = #tpu.dot_dimension_numbers<[1], [0], [0], [1], [0, 0, 1, 1], [], []>} : vector<16x32xbf16>, vector<32x256xbf16>, vector<16x256xf32> -> vector<16x256xf32>
    %c0_3 = arith.constant 0 : index
    %c0_4 = arith.constant 0 : index
    %4 = vector.load %arg3[%c0_3, %c0_4] : memref<1x256xf32, #tpu.memory_space<vmem>>, vector<1x256xf32>
    %5 = vector.broadcast %4 : vector<1x256xf32> to vector<16x256xf32>
    %6 = arith.addf %3, %5 : vector<16x256xf32>
    %c0_5 = arith.constant 0 : index
    %c0_6 = arith.constant 0 : index
    %7 = vector.load %arg4[%c0_5, %c0_6] : memref<16x1xf32, #tpu.memory_space<vmem>>, vector<16x1xf32>
    %8 = vector.broadcast %7 : vector<16x1xf32> to vector<16x256xf32>
    %9 = arith.mulf %6, %8 : vector<16x256xf32>
    %10 = vector.extract_strided_slice %9 {offsets = [0, 0], sizes = [16, 128], strides = [1, 1]} : vector<16x256xf32> to vector<16x128xf32>
    %11 = arith.truncf %10 : vector<16x128xf32> to vector<16x128xbf16>
    %c0_7 = arith.constant 0 : index
    %c0_8 = arith.constant 0 : index
    %12 = vector.load %arg5[%c0_7, %c0_8] : memref<16x128xbf16, #tpu.memory_space<vmem>>, vector<16x128xbf16>
    tpu.vector_store %arg5[%c0_7, %c0_8], %11 {strides = array<i32>} : memref<16x128xbf16, #tpu.memory_space<vmem>>, vector<16x128xbf16>,
    %13 = vector.extract_strided_slice %9 {offsets = [0, 128], sizes = [16, 128], strides = [1, 1]} : vector<16x256xf32> to vector<16x128xf32>
    %14 = arith.truncf %13 : vector<16x128xf32> to vector<16x128xbf16>
    %c0_9 = arith.constant 0 : index
    %c0_10 = arith.constant 0 : index
    %15 = vector.load %arg6[%c0_9, %c0_10] : memref<16x128xbf16, #tpu.memory_space<vmem>>, vector<16x128xbf16>
    tpu.vector_store %arg6[%c0_9, %c0_10], %14 {strides = array<i32>} : memref<16x128xbf16, #tpu.memory_space<vmem>>, vector<16x128xbf16>,
    return
  }
  func.func @transform_0(%arg0: i32) -> (i32, i32) {
    %c0_i32 = arith.constant 0 : i32
    %c0_i32_0 = arith.constant 0 : i32
    return %arg0, %c0_i32 : i32, i32
  }
  func.func @transform_1(%arg0: i32) -> (i32, i32) {
    %c0_i32 = arith.constant 0 : i32
    %c0_i32_0 = arith.constant 0 : i32
    %c0_i32_1 = arith.constant 0 : i32
    return %c0_i32, %c0_i32_0 : i32, i32
  }
  func.func @transform_2(%arg0: i32) -> (i32, i32) {
    %c0_i32 = arith.constant 0 : i32
    %c0_i32_0 = arith.constant 0 : i32
    %c0_i32_1 = arith.constant 0 : i32
    return %c0_i32, %c0_i32_0 : i32, i32
  }
  func.func @transform_3(%arg0: i32) -> (i32, i32) {
    %c0_i32 = arith.constant 0 : i32
    %c0_i32_0 = arith.constant 0 : i32
    return %arg0, %c0_i32 : i32, i32
  }
  func.func @transform_4(%arg0: i32) -> (i32, i32) {
    %c0_i32 = arith.constant 0 : i32
    %c0_i32_0 = arith.constant 0 : i32
    return %arg0, %c0_i32 : i32, i32
  }
  func.func @transform_5(%arg0: i32) -> (i32, i32) {
    %c0_i32 = arith.constant 0 : i32
    %c0_i32_0 = arith.constant 0 : i32
    return %arg0, %c0_i32 : i32, i32
  }
}

module attributes {stable_mosaic.version = 11 : i64} {
  func.func @kernel(%arg0: i32, %arg1: memref<16x32xf32, #tpu.memory_space<vmem>>, %arg2: memref<32x256xbf16, #tpu.memory_space<vmem>>, %arg3: memref<1x256xf32, #tpu.memory_space<vmem>>, %arg4: memref<16x1xf32, #tpu.memory_space<vmem>>, %arg5: memref<16x128xbf16, #tpu.memory_space<vmem>>, %arg6: memref<16x128xbf16, #tpu.memory_space<vmem>>) attributes {dimension_semantics = [#tpu.dimension_semantics<parallel>], iteration_bounds = array<i64: 1>, scalar_prefetch = 0 : i64, scratch_operands = 0 : i64, tpu.core_type = #tpu.core_type<tc>, window_params = [{transform_indices = @transform_0, window_bounds = array<i64: 16, 32>}, {pipeline_mode = #tpu.pipeline_mode<synchronous>, transform_indices = @transform_1, window_bounds = array<i64: 32, 256>}, {pipeline_mode = #tpu.pipeline_mode<synchronous>, transform_indices = @transform_2, window_bounds = array<i64: 1, 256>}, {transform_indices = @transform_3, window_bounds = array<i64: 16, 1>}, {transform_indices = @transform_4, window_bounds = array<i64: 16, 128>}, {transform_indices = @transform_5, window_bounds = array<i64: 16, 128>}]} {
    %c0 = arith.constant 0 : index
    %c0_0 = arith.constant 0 : index
    %0 = vector.load %arg1[%c0, %c0_0] : memref<16x32xf32, #tpu.memory_space<vmem>>, vector<16x32xf32>
    %1 = arith.truncf %0 : vector<16x32xf32> to vector<16x32xbf16>
    %c0_1 = arith.constant 0 : index
    %c0_2 = arith.constant 0 : index
    %2 = vector.load %arg2[%c0_1, %c0_2] : memref<32x256xbf16, #tpu.memory_space<vmem>>, vector<32x256xbf16>
    %cst = arith.constant dense<0.000000e+00> : vector<16x256xf32>
    %3 = tpu.matmul %1, %2, %cst {dimension_numbers = #tpu.dot_dimension_numbers<[1], [0], [0], [1], [0, 0, 1, 1], [], []>} : vector<16x32xbf16>, vector<32x256xbf16>, vector<16x256xf32> -> vector<16x256xf32>
    %c0_3 = arith.constant 0 : index
    %c0_4 = arith.constant 0 : index
    %4 = vector.load %arg3[%c0_3, %c0_4] : memref<1x256xf32, #tpu.memory_space<vmem>>, vector<1x256xf32>
    %5 = vector.broadcast %4 : vector<1x256xf32> to vector<16x256xf32>
    %6 = arith.addf %3, %5 : vector<16x256xf32>
    %c0_5 = arith.constant 0 : index
    %c0_6 = arith.constant 0 : index
    %7 = vector.load %arg4[%c0_5, %c0_6] : memref<16x1xf32, #tpu.memory_space<vmem>>, vector<16x1xf32>
    %8 = vector.broadcast %7 : vector<16x1xf32> to vector<16x256xf32>
    %9 = arith.mulf %6, %8 : vector<16x256xf32>
    %10 = vector.extract_strided_slice %9 {offsets = [0, 0], sizes = [16, 128], strides = [1, 1]} : vector<16x256xf32> to vector<16x128xf32>
    %11 = arith.truncf %10 : vector<16x128xf32> to vector<16x128xbf16>
    %c0_7 = arith.constant 0 : index
    %c0_8 = arith.constant 0 : index
    %12 = vector.load %arg5[%c0_7, %c0_8] : memref<16x128xbf16, #tpu.memory_space<vmem>>, vector<16x128xbf16>
    tpu.vector_store %arg5[%c0_7, %c0_8], %11 {strides = array<i32>} : memref<16x128xbf16, #tpu.memory_space<vmem>>, vector<16x128xbf16>,
    %13 = vector.extract_strided_slice %9 {offsets = [0, 128], sizes = [16, 128], strides = [1, 1]} : vector<16x256xf32> to vector<16x128xf32>
    %14 = arith.truncf %13 : vector<16x128xf32> to vector<16x128xbf16>
    %c0_9 = arith.constant 0 : index
    %c0_10 = arith.constant 0 : index
    %15 = vector.load %arg6[%c0_9, %c0_10] : memref<16x128xbf16, #tpu.memory_space<vmem>>, vector<16x128xbf16>
    tpu.vector_store %arg6[%c0_9, %c0_10], %14 {strides = array<i32>} : memref<16x128xbf16, #tpu.memory_space<vmem>>, vector<16x128xbf16>,
    return
  }
  func.func @transform_0(%arg0: i32) -> (i32, i32) {
    %c0_i32 = arith.constant 0 : i32
    %c0_i32_0 = arith.constant 0 : i32
    return %arg0, %c0_i32 : i32, i32
  }
  func.func @transform_1(%arg0: i32) -> (i32, i32) {
    %c0_i32 = arith.constant 0 : i32
    %c0_i32_0 = arith.constant 0 : i32
    %c0_i32_1 = arith.constant 0 : i32
    return %c0_i32, %c0_i32_0 : i32, i32
  }
  func.func @transform_2(%arg0: i32) -> (i32, i32) {
    %c0_i32 = arith.constant 0 : i32
    %c0_i32_0 = arith.constant 0 : i32
    %c0_i32_1 = arith.constant 0 : i32
    return %c0_i32, %c0_i32_0 : i32, i32
  }
  func.func @transform_3(%arg0: i32) -> (i32, i32) {
    %c0_i32 = arith.constant 0 : i32
    %c0_i32_0 = arith.constant 0 : i32
    return %arg0, %c0_i32 : i32, i32
  }
  func.func @transform_4(%arg0: i32) -> (i32, i32) {
    %c0_i32 = arith.constant 0 : i32
    %c0_i32_0 = arith.constant 0 : i32
    return %arg0, %c0_i32 : i32, i32
  }
  func.func @transform_5(%arg0: i32) -> (i32, i32) {
    %c0_i32 = arith.constant 0 : i32
    %c0_i32_0 = arith.constant 0 : i32
    return %arg0, %c0_i32 : i32, i32
  }
}

</mosaic_0001>

<llo_original>
// kernel: tpu_custom_call.1
$region0: #{tpu_custom_call.1}
  #allocation0 [shape = 'u32[]', space=smem, size = 0x4, offset = 0x4, fixed_abs, tag = 'smem constant byte address 0x4 - core index']
  #allocation1 [shape = 'u32[144,128]{1,0:T(1,128)}', space=vmem, size = 0x12000, scoped, tag = 'internal scratch']
  %s0 = inlined_call_operand.vmem [shape: f32[16,32], index: 0, kind: input, shape index: {}]
  %s1 = inlined_call_operand.hbm [shape: bf16[32,256], index: 1, kind: input, shape index: {}]
  %s2 = inlined_call_operand.vmem [shape: f32[1,256], index: 2, kind: input, shape index: {}]
  %s3 = inlined_call_operand.vmem [shape: f32[16,1], index: 3, kind: input, shape index: {}]
  %s4 = inlined_call_operand.hbm [shape: bf16[16,128], index: 4, kind: output, shape index: {0}]
  %s5 = inlined_call_operand.hbm [shape: bf16[16,128], index: 5, kind: output, shape index: {1}]
  %6 = xla_tuple %s4, %s5
  %s7 = sld [smem:[#allocation0]]
  $region38: #{tpu_custom_call.1} parent=0
    _
  %s9 = ssub.s32 1, %s7
  %s10 = scalar_select 0, %s9, %s7
  $region1: #{tpu_custom_call.1} parent=0
    #allocation2 [shape = 'u8[16384]{0}', space=vmem, size = 0x4000, scoped, tag = 'input window, operand 1, single buffered']
    #allocation3 [shape = 's32[1]{0}', space=sflag, size = 0x4, scoped, tag = 'scoped memory for tpu_custom_call.1']
    #allocation4 [shape = 's32[1]{0}', space=sflag, size = 0x4, scoped, tag = 'scoped memory for tpu_custom_call.1']
    #allocation5 [shape = 'u8[4096]{0}', space=vmem, size = 0x1000, scoped, tag = 'output window, operand 0, single buffered']
    #allocation6 [shape = 'u8[4096]{0}', space=vmem, size = 0x1000, scoped, tag = 'output window, operand 1, single buffered']
    #allocation7 [shape = 's32[1]{0}', space=sflag, size = 0x4, scoped, tag = 'scoped memory for tpu_custom_call.1']
    %11 = vsyncpa [#allocation3], 0
    %12 = vsyncpa [#allocation4], 0
    %13 = vsyncpa [#allocation7], 0
    // Predicated region
    $region2: #{tpu_custom_call.1} parent=1 // pred_check
      _
    $region3: #{tpu_custom_call.1} parent=1 // pred_check_branch
      %15 = sbr.rel (0) target = $region5
    $region4: #{tpu_custom_call.1} parent=1 // pred_region
      _
    $region5: #{tpu_custom_call.1} parent=1 // pred_fallthru
      _
    // Predicated region
    $region6: #{tpu_custom_call.1} parent=1 // pred_check
      _
    $region7: #{tpu_custom_call.1} parent=1 // pred_check_branch
      %17 = sbr.rel (0) target = $region9
    $region8: #{tpu_custom_call.1} parent=1 // pred_region
      %s19 = ssub.s32 512, 512
      %20 = vsyncadd [#allocation3], %s19
      %s21 = sshll.u32 [#allocation2], 4
      %s22 = int_to_ptr.vmem [resolvable:$true] %s21
      %27 = dma.hbm_to_vmem [thread:$0]  %s1, 512, %s22, [#allocation3], 128, 128, 8
    $region9: #{tpu_custom_call.1} parent=1 // pred_fallthru
      _
    // Predicated region
    $region10: #{tpu_custom_call.1} parent=1 // pred_check
      _
    $region11: #{tpu_custom_call.1} parent=1 // pred_check_branch
      %29 = sbr.rel (0) target = $region13
    $region12: #{tpu_custom_call.1} parent=1 // pred_region
      _
    $region13: #{tpu_custom_call.1} parent=1 // pred_fallthru
      _
    // Predicated region
    $region14: #{tpu_custom_call.1} parent=1 // pred_check
      _
    $region15: #{tpu_custom_call.1} parent=1 // pred_check_branch
      %31 = sbr.rel (0) target = $region17
    $region16: #{tpu_custom_call.1} parent=1 // pred_region
      _
    $region17: #{tpu_custom_call.1} parent=1 // pred_fallthru
      _
    // Predicated region
    $region18: #{tpu_custom_call.1} parent=1 // pred_check
      _
    $region19: #{tpu_custom_call.1} parent=1 // pred_check_branch
      %33 = sbr.rel (0) target = $region21
    $region20: #{tpu_custom_call.1} parent=1 // pred_region
      %34 = dma.done [#allocation3], 512
    $region21: #{tpu_custom_call.1} parent=1 // pred_fallthru
      _
    %v36 = vld [vmem:[%s0] sm:$0xff]
    %v37 = vld [vmem:[%s0 + $0x8] sm:$0xff]
    %v38 = vpack.c.bf16 %v37, %v36
    %v39 = vld [vmem:[#allocation2] sm:$0xff]
    %v40 = vld [vmem:[#allocation2 + $0x8] sm:$0xff]
    %v41 = vld [vmem:[#allocation2 + $0x10] sm:$0xff]
    %v42 = vld [vmem:[#allocation2 + $0x18] sm:$0xff]
    %v43 = vld [vmem:[%s2] sm:$0x3]
    %v45 = vlaneseq
    %v46 = vshrl.u32 %v45, 7
    %v47 = vsub.s32 0, %v46
    %v48 = vrot.slane %v43, %v47
    %v49 = vlaneseq
    %v50 = vshrl.u32 %v49, 7
    %v51 = vsub.s32 1, %v50
    %v52 = vrot.slane %v43, %v51
    %v59 = vunpack.c.l.b16 %v39
    %v60 = vunpack.c.h.b16 %v39
    %v61 = vunpack.c.l.b16 %v40
    %v62 = vunpack.c.h.b16 %v40
    %v63 = vunpack.c.l.b16 %v41
    %v64 = vunpack.c.h.b16 %v41
    %v65 = vunpack.c.l.b16 %v42
    %v66 = vunpack.c.h.b16 %v42
    %v67 = vpack.c.b16 %v61, %v59
    %v68 = vpack.c.b16 %v62, %v60
    %v69 = vpack.c.b16 %v65, %v63
    %v70 = vpack.c.b16 %v66, %v64
    %vm75 = vcmask 261120
    %v77 = vsel %vm75, %v38, 0
    %79 = vmatprep.subr.bf16.mxu0 0
    %80 = vmatpush1.bf16.msra.mxu0 0
    %81 = vmatprep.subr.bf16.mxu0 0
    %82 = vmatpush1.bf16.msra.mxu0 0
    %83 = vmatprep.subr.bf16.mxu0 0
    %84 = vmatpush1.bf16.msra.mxu0 0
    %85 = vmatprep.subr.bf16.mxu0 0
    %86 = vmatpush1.bf16.msra.mxu0 0
    %87 = vmatprep.subr.bf16.mxu0 0
    %88 = vmatpush1.bf16.msra.mxu0 0
    %89 = vmatprep.subr.bf16.mxu0 0
    %90 = vmatpush1.bf16.msra.mxu0 0
    %91 = vmatprep.subr.bf16.mxu0 %v70
    %92 = vmatpush1.bf16.msra.mxu0 %v69
    %93 = vmatprep.subr.bf16.mxu0 %v68
    %94 = vmatpush1.bf16.msra.mxu0 %v67
    %95 = vmatprep.subr.bf16.mxu0 0
    %96 = vmatpush2.bf16.msra.mxu0 0
    %97 = vmatprep.subr.bf16.mxu0 0
    %98 = vmatpush2.bf16.msra.mxu0 0
    %99 = vmatprep.subr.bf16.mxu0 0
    %100 = vmatpush2.bf16.msra.mxu0 0
    %101 = vmatprep.subr.bf16.mxu0 0
    %102 = vmatpush2.bf16.msra.mxu0 0
    %103 = vmatprep.subr.bf16.mxu0 0
    %104 = vmatpush2.bf16.msra.mxu0 0
    %105 = vmatprep.subr.bf16.mxu0 0
    %106 = vmatpush2.bf16.msra.mxu0 0
    %107 = vmatprep.subr.bf16.mxu0 0
    %108 = vmatpush2.bf16.msra.mxu0 0
    %109 = vmatprep.subr.bf16.mxu0 0
    %110 = vmatpush2.bf16.msra.mxu0 0
    %111 = vmatprep.mubr.bf16.mxu0 0
    %112 = vmatmul.mubr.bf16.gmra.mxu0 %v77
    %v113 = vpop.f32.mrf.mxu0
    %v114 = vadd.f32 %v48, %v113
    %v115 = vpop.f32.mrf.mxu0
    %v116 = vadd.f32 %v52, %v115
    %v117 = vpop.f32.mrf.mxu0
    %v118 = vadd.f32 %v48, %v117
    %v119 = vpop.f32.mrf.mxu0
    %v120 = vadd.f32 %v52, %v119
    %121 = vdwg.mxu0
    %v122 = vld [vmem:[%s3] sm:$0xff]
    %v123 = vld [vmem:[%s3 + $0x8] sm:$0xff]
    %125 = vset.pattern.permute.xlu0 0
    %126 = vperm.xlu0 %125, %v122
    %v127 = vpop.permute.xlu0 %126
    %130 = vset.pattern.permute.xlu0 0
    %131 = vperm.xlu0 %130, %v123
    %v132 = vpop.permute.xlu0 %131
    %v134 = vmul.f32 %v114, %v127
    %v135 = vmul.f32 %v116, %v127
    %v136 = vmul.f32 %v118, %v132
    %v137 = vmul.f32 %v120, %v132
    %v138 = vpack.c.bf16 %v136, %v134
    %v140 = vunpack.c.l.b16 %v138
    %v141 = vunpack.c.h.b16 %v138
    %v142 = vpack.c.b16 %v140, %v140
    %v143 = vpack.c.b16 %v141, %v141
    %146 = vst [vmem:[#allocation5] sm:$0xf] %v142
    %147 = vst [vmem:[#allocation5 + $0x4] sm:$0xf] %v143
    %v148 = vpack.c.bf16 %v137, %v135
    %v150 = vunpack.c.l.b16 %v148
    %v151 = vunpack.c.h.b16 %v148
    %v152 = vpack.c.b16 %v150, %v150
    %v153 = vpack.c.b16 %v151, %v151
    %156 = vst [vmem:[#allocation6] sm:$0xf] %v152
    %157 = vst [vmem:[#allocation6 + $0x4] sm:$0xf] %v153
    // Predicated region
    $region22: #{tpu_custom_call.1} parent=1 // pred_check
      _
    $region23: #{tpu_custom_call.1} parent=1 // pred_check_branch
      %159 = sbr.rel (0) target = $region25
    $region24: #{tpu_custom_call.1} parent=1 // pred_region
      %s161 = ssub.s32 128, 128
      %162 = vsyncadd [#allocation4], %s161
      %s163 = sshll.u32 [#allocation5], 4
      %s164 = int_to_ptr.vmem [resolvable:$true] %s163
      %169 = dma.vmem_to_hbm [thread:$0]  %s164, 128, %s4, [#allocation4], 64, 64, 4
    $region25: #{tpu_custom_call.1} parent=1 // pred_fallthru
      _
    // Predicated region
    $region26: #{tpu_custom_call.1} parent=1 // pred_check
      _
    $region27: #{tpu_custom_call.1} parent=1 // pred_check_branch
      %171 = sbr.rel (0) target = $region29
    $region28: #{tpu_custom_call.1} parent=1 // pred_region
      %s173 = ssub.s32 128, 128
      %174 = vsyncadd [#allocation7], %s173
      %s175 = sshll.u32 [#allocation6], 4
      %s176 = int_to_ptr.vmem [resolvable:$true] %s175
      %181 = dma.vmem_to_hbm [thread:$0]  %s176, 128, %s5, [#allocation7], 64, 64, 4
    $region29: #{tpu_custom_call.1} parent=1 // pred_fallthru
      _
    // Predicated region
    $region30: #{tpu_custom_call.1} parent=1 // pred_check
      _
    $region31: #{tpu_custom_call.1} parent=1 // pred_check_branch
      %183 = sbr.rel (0) target = $region33
    $region32: #{tpu_custom_call.1} parent=1 // pred_region
      %184 = dma.done [#allocation4], 128
    $region33: #{tpu_custom_call.1} parent=1 // pred_fallthru
      _
    // Predicated region
    $region34: #{tpu_custom_call.1} parent=1 // pred_check
      _
    $region35: #{tpu_custom_call.1} parent=1 // pred_check_branch
      %186 = sbr.rel (0) target = $region37
    $region36: #{tpu_custom_call.1} parent=1 // pred_region
      %187 = dma.done [#allocation7], 128
    $region37: #{tpu_custom_call.1} parent=1 // pred_fallthru
      _
    %188 = vsyncpa [#allocation3], 1
    %189 = vsyncpa [#allocation4], 1
    %190 = vsyncpa [#allocation7], 1

// kernel: tpu_custom_call.1
$region0: #{tpu_custom_call.1}
  #allocation0 [shape = 'u32[]', space=smem, size = 0x4, offset = 0x4, fixed_abs, tag = 'smem constant byte address 0x4 - core index']
  #allocation1 [shape = 'u32[144,128]{1,0:T(1,128)}', space=vmem, size = 0x12000, scoped, tag = 'internal scratch']
  %s0 = inlined_call_operand.vmem [shape: f32[16,32], index: 0, kind: input, shape index: {}]
  %s1 = inlined_call_operand.hbm [shape: bf16[32,256], index: 1, kind: input, shape index: {}]
  %s2 = inlined_call_operand.vmem [shape: f32[1,256], index: 2, kind: input, shape index: {}]
  %s3 = inlined_call_operand.vmem [shape: f32[16,1], index: 3, kind: input, shape index: {}]
  %s4 = inlined_call_operand.hbm [shape: bf16[16,128], index: 4, kind: output, shape index: {0}]
  %s5 = inlined_call_operand.hbm [shape: bf16[16,128], index: 5, kind: output, shape index: {1}]
  %6 = xla_tuple %s4, %s5
  %s7 = sld [smem:[#allocation0]]
  $region38: #{tpu_custom_call.1} parent=0
    _
  %s9 = ssub.s32 1, %s7
  %s10 = scalar_select 0, %s9, %s7
  $region1: #{tpu_custom_call.1} parent=0
    #allocation2 [shape = 'u8[16384]{0}', space=vmem, size = 0x4000, scoped, tag = 'input window, operand 1, single buffered']
    #allocation3 [shape = 's32[1]{0}', space=sflag, size = 0x4, scoped, tag = 'scoped memory for tpu_custom_call.1']
    #allocation4 [shape = 's32[1]{0}', space=sflag, size = 0x4, scoped, tag = 'scoped memory for tpu_custom_call.1']
    #allocation5 [shape = 'u8[4096]{0}', space=vmem, size = 0x1000, scoped, tag = 'output window, operand 0, single buffered']
    #allocation6 [shape = 'u8[4096]{0}', space=vmem, size = 0x1000, scoped, tag = 'output window, operand 1, single buffered']
    #allocation7 [shape = 's32[1]{0}', space=sflag, size = 0x4, scoped, tag = 'scoped memory for tpu_custom_call.1']
    %11 = vsyncpa [#allocation3], 0
    %12 = vsyncpa [#allocation4], 0
    %13 = vsyncpa [#allocation7], 0
    // Predicated region
    $region2: #{tpu_custom_call.1} parent=1 // pred_check
      _
    $region3: #{tpu_custom_call.1} parent=1 // pred_check_branch
      %15 = sbr.rel (0) target = $region5
    $region4: #{tpu_custom_call.1} parent=1 // pred_region
      _
    $region5: #{tpu_custom_call.1} parent=1 // pred_fallthru
      _
    // Predicated region
    $region6: #{tpu_custom_call.1} parent=1 // pred_check
      _
    $region7: #{tpu_custom_call.1} parent=1 // pred_check_branch
      %17 = sbr.rel (0) target = $region9
    $region8: #{tpu_custom_call.1} parent=1 // pred_region
      %s19 = ssub.s32 512, 512
      %20 = vsyncadd [#allocation3], %s19
      %s21 = sshll.u32 [#allocation2], 4
      %s22 = int_to_ptr.vmem [resolvable:$true] %s21
      %27 = dma.hbm_to_vmem [thread:$0]  %s1, 512, %s22, [#allocation3], 128, 128, 8
    $region9: #{tpu_custom_call.1} parent=1 // pred_fallthru
      _
    // Predicated region
    $region10: #{tpu_custom_call.1} parent=1 // pred_check
      _
    $region11: #{tpu_custom_call.1} parent=1 // pred_check_branch
      %29 = sbr.rel (0) target = $region13
    $region12: #{tpu_custom_call.1} parent=1 // pred_region
      _
    $region13: #{tpu_custom_call.1} parent=1 // pred_fallthru
      _
    // Predicated region
    $region14: #{tpu_custom_call.1} parent=1 // pred_check
      _
    $region15: #{tpu_custom_call.1} parent=1 // pred_check_branch
      %31 = sbr.rel (0) target = $region17
    $region16: #{tpu_custom_call.1} parent=1 // pred_region
      _
    $region17: #{tpu_custom_call.1} parent=1 // pred_fallthru
      _
    // Predicated region
    $region18: #{tpu_custom_call.1} parent=1 // pred_check
      _
    $region19: #{tpu_custom_call.1} parent=1 // pred_check_branch
      %33 = sbr.rel (0) target = $region21
    $region20: #{tpu_custom_call.1} parent=1 // pred_region
      %34 = dma.done [#allocation3], 512
    $region21: #{tpu_custom_call.1} parent=1 // pred_fallthru
      _
    %v36 = vld [vmem:[%s0] sm:$0xff]
    %v37 = vld [vmem:[%s0 + $0x8] sm:$0xff]
    %v38 = vpack.c.bf16 %v37, %v36
    %v39 = vld [vmem:[#allocation2] sm:$0xff]
    %v40 = vld [vmem:[#allocation2 + $0x8] sm:$0xff]
    %v41 = vld [vmem:[#allocation2 + $0x10] sm:$0xff]
    %v42 = vld [vmem:[#allocation2 + $0x18] sm:$0xff]
    %v43 = vld [vmem:[%s2] sm:$0x3]
    %v45 = vlaneseq
    %v46 = vshrl.u32 %v45, 7
    %v47 = vsub.s32 0, %v46
    %v48 = vrot.slane %v43, %v47
    %v49 = vlaneseq
    %v50 = vshrl.u32 %v49, 7
    %v51 = vsub.s32 1, %v50
    %v52 = vrot.slane %v43, %v51
    %v59 = vunpack.c.l.b16 %v39
    %v60 = vunpack.c.h.b16 %v39
    %v61 = vunpack.c.l.b16 %v40
    %v62 = vunpack.c.h.b16 %v40
    %v63 = vunpack.c.l.b16 %v41
    %v64 = vunpack.c.h.b16 %v41
    %v65 = vunpack.c.l.b16 %v42
    %v66 = vunpack.c.h.b16 %v42
    %v67 = vpack.c.b16 %v61, %v59
    %v68 = vpack.c.b16 %v62, %v60
    %v69 = vpack.c.b16 %v65, %v63
    %v70 = vpack.c.b16 %v66, %v64
    %vm75 = vcmask 261120
    %v77 = vsel %vm75, %v38, 0
    %79 = vmatprep.subr.bf16.mxu0 0
    %80 = vmatpush1.bf16.msra.mxu0 0
    %81 = vmatprep.subr.bf16.mxu0 0
    %82 = vmatpush1.bf16.msra.mxu0 0
    %83 = vmatprep.subr.bf16.mxu0 0
    %84 = vmatpush1.bf16.msra.mxu0 0
    %85 = vmatprep.subr.bf16.mxu0 0
    %86 = vmatpush1.bf16.msra.mxu0 0
    %87 = vmatprep.subr.bf16.mxu0 0
    %88 = vmatpush1.bf16.msra.mxu0 0
    %89 = vmatprep.subr.bf16.mxu0 0
    %90 = vmatpush1.bf16.msra.mxu0 0
    %91 = vmatprep.subr.bf16.mxu0 %v70
    %92 = vmatpush1.bf16.msra.mxu0 %v69
    %93 = vmatprep.subr.bf16.mxu0 %v68
    %94 = vmatpush1.bf16.msra.mxu0 %v67
    %95 = vmatprep.subr.bf16.mxu0 0
    %96 = vmatpush2.bf16.msra.mxu0 0
    %97 = vmatprep.subr.bf16.mxu0 0
    %98 = vmatpush2.bf16.msra.mxu0 0
    %99 = vmatprep.subr.bf16.mxu0 0
    %100 = vmatpush2.bf16.msra.mxu0 0
    %101 = vmatprep.subr.bf16.mxu0 0
    %102 = vmatpush2.bf16.msra.mxu0 0
    %103 = vmatprep.subr.bf16.mxu0 0
    %104 = vmatpush2.bf16.msra.mxu0 0
    %105 = vmatprep.subr.bf16.mxu0 0
    %106 = vmatpush2.bf16.msra.mxu0 0
    %107 = vmatprep.subr.bf16.mxu0 0
    %108 = vmatpush2.bf16.msra.mxu0 0
    %109 = vmatprep.subr.bf16.mxu0 0
    %110 = vmatpush2.bf16.msra.mxu0 0
    %111 = vmatprep.mubr.bf16.mxu0 0
    %112 = vmatmul.mubr.bf16.gmra.mxu0 %v77
    %v113 = vpop.f32.mrf.mxu0
    %v114 = vadd.f32 %v48, %v113
    %v115 = vpop.f32.mrf.mxu0
    %v116 = vadd.f32 %v52, %v115
    %v117 = vpop.f32.mrf.mxu0
    %v118 = vadd.f32 %v48, %v117
    %v119 = vpop.f32.mrf.mxu0
    %v120 = vadd.f32 %v52, %v119
    %121 = vdwg.mxu0
    %v122 = vld [vmem:[%s3] sm:$0xff]
    %v123 = vld [vmem:[%s3 + $0x8] sm:$0xff]
    %125 = vset.pattern.permute.xlu0 0
    %126 = vperm.xlu0 %125, %v122
    %v127 = vpop.permute.xlu0 %126
    %130 = vset.pattern.permute.xlu0 0
    %131 = vperm.xlu0 %130, %v123
    %v132 = vpop.permute.xlu0 %131
    %v134 = vmul.f32 %v114, %v127
    %v135 = vmul.f32 %v116, %v127
    %v136 = vmul.f32 %v118, %v132
    %v137 = vmul.f32 %v120, %v132
    %v138 = vpack.c.bf16 %v136, %v134
    %v140 = vunpack.c.l.b16 %v138
    %v141 = vunpack.c.h.b16 %v138
    %v142 = vpack.c.b16 %v140, %v140
    %v143 = vpack.c.b16 %v141, %v141
    %146 = vst [vmem:[#allocation5] sm:$0xf] %v142
    %147 = vst [vmem:[#allocation5 + $0x4] sm:$0xf] %v143
    %v148 = vpack.c.bf16 %v137, %v135
    %v150 = vunpack.c.l.b16 %v148
    %v151 = vunpack.c.h.b16 %v148
    %v152 = vpack.c.b16 %v150, %v150
    %v153 = vpack.c.b16 %v151, %v151
    %156 = vst [vmem:[#allocation6] sm:$0xf] %v152
    %157 = vst [vmem:[#allocation6 + $0x4] sm:$0xf] %v153
    // Predicated region
    $region22: #{tpu_custom_call.1} parent=1 // pred_check
      _
    $region23: #{tpu_custom_call.1} parent=1 // pred_check_branch
      %159 = sbr.rel (0) target = $region25
    $region24: #{tpu_custom_call.1} parent=1 // pred_region
      %s161 = ssub.s32 128, 128
      %162 = vsyncadd [#allocation4], %s161
      %s163 = sshll.u32 [#allocation5], 4
      %s164 = int_to_ptr.vmem [resolvable:$true] %s163
      %169 = dma.vmem_to_hbm [thread:$0]  %s164, 128, %s4, [#allocation4], 64, 64, 4
    $region25: #{tpu_custom_call.1} parent=1 // pred_fallthru
      _
    // Predicated region
    $region26: #{tpu_custom_call.1} parent=1 // pred_check
      _
    $region27: #{tpu_custom_call.1} parent=1 // pred_check_branch
      %171 = sbr.rel (0) target = $region29
    $region28: #{tpu_custom_call.1} parent=1 // pred_region
      %s173 = ssub.s32 128, 128
      %174 = vsyncadd [#allocation7], %s173
      %s175 = sshll.u32 [#allocation6], 4
      %s176 = int_to_ptr.vmem [resolvable:$true] %s175
      %181 = dma.vmem_to_hbm [thread:$0]  %s176, 128, %s5, [#allocation7], 64, 64, 4
    $region29: #{tpu_custom_call.1} parent=1 // pred_fallthru
      _
    // Predicated region
    $region30: #{tpu_custom_call.1} parent=1 // pred_check
      _
    $region31: #{tpu_custom_call.1} parent=1 // pred_check_branch
      %183 = sbr.rel (0) target = $region33
    $region32: #{tpu_custom_call.1} parent=1 // pred_region
      %184 = dma.done [#allocation4], 128
    $region33: #{tpu_custom_call.1} parent=1 // pred_fallthru
      _
    // Predicated region
    $region34: #{tpu_custom_call.1} parent=1 // pred_check
      _
    $region35: #{tpu_custom_call.1} parent=1 // pred_check_branch
      %186 = sbr.rel (0) target = $region37
    $region36: #{tpu_custom_call.1} parent=1 // pred_region
      %187 = dma.done [#allocation7], 128
    $region37: #{tpu_custom_call.1} parent=1 // pred_fallthru
      _
    %188 = vsyncpa [#allocation3], 1
    %189 = vsyncpa [#allocation4], 1
    %190 = vsyncpa [#allocation7], 1

</llo_original>
